<compile_context>
chip_gen: v6e
topology: v6e:2x2x1
jax: 0.10.0
libtpu: 0.0.40
codegen_flags: <defaults>
</compile_context>

<pallas_src>
import jax
import jax.numpy as jnp
from jax.experimental import pallas as pl
from jax.experimental.pallas import tpu as pltpu


def _round_up(x, m):
    return ((x + m - 1) // m) * m


def _bpr_social_kernel(u_ref, i_ref, w_ref, uall_ref, out_ref, acc_ref):
    k = pl.program_id(1)

    @pl.when(k == 0)
    def _():
        acc_ref[...] = jnp.zeros_like(acc_ref)

    # (tb, tu) @ (tu, Dp) -> (tb, Dp) on the MXU, f32 accumulation.
    acc_ref[...] += jnp.dot(w_ref[...], uall_ref[...],
                            preferred_element_type=jnp.float32)

    @pl.when(k == pl.num_programs(1) - 1)
    def _():
        u = u_ref[...].astype(jnp.float32)
        it = i_ref[...].astype(jnp.float32)
        # out[b] = <u_b + (w_b @ U_all), i_b>
        out_ref[...] = jnp.sum((acc_ref[...] + u) * it, axis=-1, keepdims=True)


def _bpr_dot_kernel(u_ref, i_ref, out_ref):
    # social=False path: only the per-example dot product.
    u = u_ref[...].astype(jnp.float32)
    it = i_ref[...].astype(jnp.float32)
    out_ref[...] = jnp.sum(u * it, axis=-1, keepdims=True)


def bpr_forward(users, items, user_emb, item_emb, social_weight, *,
                social=True, tb=256, tu=4096,
                compute_dtype=jnp.bfloat16):
    """Forward pass of the BPR module (method='BPR').

    Defaults (tb=256, tu=4096, bf16 streaming, f32 accumulation) fit inside the
    default scoped VMEM on every generation (v5e/v6e: 128 MiB physical, v7x:
    64 MiB).  On v5e/v6e roughly double tb/tu (and raise vmem_limit_bytes) to
    amortize per-grid-step overhead; keep tb a multiple of 128.
    """
    assert users.shape[0] == items.shape[0]
    B = users.shape[0]
    U, D = user_emb.shape

    # ---- plain-JAX glue: gathers, casts, zero-padding ----------------------
    u_b = user_emb[users].astype(compute_dtype)   # (B, D)
    i_b = item_emb[items].astype(compute_dtype)   # (B, D)

    tb = min(tb, _round_up(B, 8))
    B_pad = _round_up(B, tb)
    D_pad = _round_up(D, 128)

    u_b = jnp.pad(u_b, ((0, B_pad - B), (0, D_pad - D)))
    i_b = jnp.pad(i_b, ((0, B_pad - B), (0, D_pad - D)))

    if not social:
        # No social term: do NOT materialize a (B, U) zeros array or run the
        # (B,U)@(U,D) matmul that would be multiplied by zero.
        out = pl.pallas_call(
            _bpr_dot_kernel,
            out_shape=jax.ShapeDtypeStruct((B_pad, 1), jnp.float32),
            grid=(B_pad // tb,),
            in_specs=[pl.BlockSpec((tb, D_pad), lambda i: (i, 0)),
                      pl.BlockSpec((tb, D_pad), lambda i: (i, 0))],
            out_specs=pl.BlockSpec((tb, 1), lambda i: (i, 0)),
            compiler_params=pltpu.CompilerParams(
                dimension_semantics=("parallel",)),
        )(u_b, i_b)
        return out[:B, 0]

    tu = min(tu, _round_up(U, 128))
    U_pad = _round_up(U, tu)

    w_b = social_weight[users].astype(compute_dtype)           # (B, U)
    w_b = jnp.pad(w_b, ((0, B_pad - B), (0, U_pad - U)))        # zero pads
    u_all = jnp.pad(user_emb.astype(compute_dtype),
                    ((0, U_pad - U), (0, D_pad - D)))           # (U_pad, D_pad)

    bytes_per = jnp.dtype(compute_dtype).itemsize
    cost = pl.CostEstimate(
        flops=2 * B_pad * U_pad * D_pad + 2 * B_pad * D_pad,
        transcendentals=0,
        bytes_accessed=(B_pad * U_pad + U_pad * D_pad + 2 * B_pad * D_pad)
        * bytes_per + B_pad * 4,
    )

    out = pl.pallas_call(
        _bpr_social_kernel,
        out_shape=jax.ShapeDtypeStruct((B_pad, 1), jnp.float32),
        grid_spec=pltpu.PrefetchScalarGridSpec(
            num_scalar_prefetch=0,
            grid=(B_pad // tb, U_pad // tu),
            in_specs=[
                pl.BlockSpec((tb, D_pad), lambda i, k: (i, 0)),   # u_b  (resident)
                pl.BlockSpec((tb, D_pad), lambda i, k: (i, 0)),   # i_b  (resident)
                pl.BlockSpec((tb, tu),    lambda i, k: (i, k)),   # w_b  (streamed)
                pl.BlockSpec((tu, D_pad), lambda i, k: (k, 0)),   # u_all (streamed)
            ],
            out_specs=pl.BlockSpec((tb, 1), lambda i, k: (i, 0)),
            scratch_shapes=[pltpu.VMEM((tb, D_pad), jnp.float32)],
        ),
        compiler_params=pltpu.CompilerParams(
            dimension_semantics=("parallel", "arbitrary")),
        cost_estimate=cost,
    )(u_b, i_b, w_b, u_all)

    return out[:B, 0]   # (B,), matches torch .squeeze()


# TODO(synk): sample_negs() (host-side dict lookup + randint) and loss() are
# training-time utilities outside the forward pass; not implemented as kernels.


if __name__ == "__main__":
    # Small shapes consistent with the module's __init__.
    num_users = 12
    num_items = 20
    embed_dim = 32
    batch = 8

    key = jax.random.PRNGKey(0)
    k_ue, k_ie, k_sw, k_u, k_i = jax.random.split(key, 5)

    user_emb = jax.random.normal(k_ue, (num_users, embed_dim), dtype=jnp.float32)
    item_emb = jax.random.normal(k_ie, (num_items, embed_dim), dtype=jnp.float32)
    social_sim = jax.random.uniform(k_sw, (num_users, num_users), dtype=jnp.float32)

    users = jax.random.randint(k_u, (batch,), 0, num_users)
    items = jax.random.randint(k_i, (batch,), 0, num_items)

    preds = bpr_forward(users, items, user_emb, item_emb, social_sim, social=True)
    preds = jax.block_until_ready(preds)

    preds_ns = bpr_forward(users, items, user_emb, item_emb, social_sim, social=False)
    preds_ns = jax.block_until_ready(preds_ns)

    # Reference in plain JAX on bf16-rounded inputs with f32 accumulation —
    # same math as the torch forward, matches the kernel up to summation-order
    # rounding.
    def rnd(x):
        return x.astype(jnp.bfloat16).astype(jnp.float32)

    u_b = rnd(user_emb[users])
    i_b = rnd(item_emb[items])
    w_b = rnd(social_sim[users])
    u_all = rnd(user_emb)
    ref_pos = jnp.sum(u_b * i_b, axis=-1)
    ref_social = jnp.sum(w_b * (i_b @ u_all.T), axis=-1)
    ref = ref_pos + ref_social

    assert preds.shape == (batch,)
    assert preds_ns.shape == (batch,)
    assert jnp.allclose(preds, ref, rtol=1e-4, atol=1e-4)
    assert jnp.allclose(preds_ns, ref_pos, rtol=1e-4, atol=1e-4)

    print("KERNEL_OK")
</pallas_src>

<mosaic_0001>
module attributes {stable_mosaic.version = 11 : i64} {
  func.func @_bpr_social_kernel(%arg0: i32, %arg1: i32, %arg2: memref<8x128xbf16, #tpu.memory_space<vmem>>, %arg3: memref<8x128xbf16, #tpu.memory_space<vmem>>, %arg4: memref<8x128xbf16, #tpu.memory_space<vmem>>, %arg5: memref<128x128xbf16, #tpu.memory_space<vmem>>, %arg6: memref<8x1xf32, #tpu.memory_space<vmem>>, %arg7: memref<8x128xf32, #tpu.memory_space<vmem>>) attributes {dimension_semantics = [#tpu.dimension_semantics<parallel>, #tpu.dimension_semantics<arbitrary>], iteration_bounds = array<i64: 1, 1>, scalar_prefetch = 0 : i64, scratch_operands = 1 : i64, tpu.core_type = #tpu.core_type<tc>, window_params = [{transform_indices = @transform_0, window_bounds = array<i64: 8, 128>}, {transform_indices = @transform_1, window_bounds = array<i64: 8, 128>}, {transform_indices = @transform_2, window_bounds = array<i64: 8, 128>}, {transform_indices = @transform_3, window_bounds = array<i64: 128, 128>}, {transform_indices = @transform_4, window_bounds = array<i64: 8, 1>}]} {
    %c0_i32 = arith.constant 0 : i32
    %0 = arith.cmpi eq, %arg1, %c0_i32 : i32
    %1 = arith.extui %0 : i1 to i32
    %c0_i32_0 = arith.constant 0 : i32
    %2 = arith.cmpi ne, %1, %c0_i32_0 : i32
    scf.if %2 {
      %cst_10 = arith.constant 0.000000e+00 : f32
      %12 = vector.broadcast %cst_10 : f32 to vector<8x128xf32>
      %c0_11 = arith.constant 0 : index
      %c0_12 = arith.constant 0 : index
      %13 = vector.load %arg7[%c0_11, %c0_12] : memref<8x128xf32, #tpu.memory_space<vmem>>, vector<8x128xf32>
      tpu.vector_store %arg7[%c0_11, %c0_12], %12 {strides = array<i32>} : memref<8x128xf32, #tpu.memory_space<vmem>>, vector<8x128xf32>,
    } else {
    }
    %c0 = arith.constant 0 : index
    %c0_1 = arith.constant 0 : index
    %3 = vector.load %arg7[%c0, %c0_1] : memref<8x128xf32, #tpu.memory_space<vmem>>, vector<8x128xf32>
    %c0_2 = arith.constant 0 : index
    %c0_3 = arith.constant 0 : index
    %4 = vector.load %arg4[%c0_2, %c0_3] : memref<8x128xbf16, #tpu.memory_space<vmem>>, vector<8x128xbf16>
    %c0_4 = arith.constant 0 : index
    %c0_5 = arith.constant 0 : index
    %5 = vector.load %arg5[%c0_4, %c0_5] : memref<128x128xbf16, #tpu.memory_space<vmem>>, vector<128x128xbf16>
    %cst = arith.constant dense<0.000000e+00> : vector<8x128xf32>
    %6 = tpu.matmul %4, %5, %cst {dimension_numbers = #tpu.dot_dimension_numbers<[1], [0], [0], [1], [0, 0, 1, 1], [], []>} : vector<8x128xbf16>, vector<128x128xbf16>, vector<8x128xf32> -> vector<8x128xf32>
    %7 = arith.addf %3, %6 : vector<8x128xf32>
    %c0_6 = arith.constant 0 : index
    %c0_7 = arith.constant 0 : index
    %8 = vector.load %arg7[%c0_6, %c0_7] : memref<8x128xf32, #tpu.memory_space<vmem>>, vector<8x128xf32>
    tpu.vector_store %arg7[%c0_6, %c0_7], %7 {strides = array<i32>} : memref<8x128xf32, #tpu.memory_space<vmem>>, vector<8x128xf32>,
    %c0_i32_8 = arith.constant 0 : i32
    %9 = arith.cmpi eq, %arg1, %c0_i32_8 : i32
    %10 = arith.extui %9 : i1 to i32
    %c0_i32_9 = arith.constant 0 : i32
    %11 = arith.cmpi ne, %10, %c0_i32_9 : i32
    scf.if %11 {
      %c0_10 = arith.constant 0 : index
      %c0_11 = arith.constant 0 : index
      %12 = vector.load %arg2[%c0_10, %c0_11] : memref<8x128xbf16, #tpu.memory_space<vmem>>, vector<8x128xbf16>
      %13 = arith.extf %12 : vector<8x128xbf16> to vector<8x128xf32>
      %c0_12 = arith.constant 0 : index
      %c0_13 = arith.constant 0 : index
      %14 = vector.load %arg3[%c0_12, %c0_13] : memref<8x128xbf16, #tpu.memory_space<vmem>>, vector<8x128xbf16>
      %15 = arith.extf %14 : vector<8x128xbf16> to vector<8x128xf32>
      %c0_14 = arith.constant 0 : index
      %c0_15 = arith.constant 0 : index
      %16 = vector.load %arg7[%c0_14, %c0_15] : memref<8x128xf32, #tpu.memory_space<vmem>>, vector<8x128xf32>
      %17 = arith.addf %16, %13 : vector<8x128xf32>
      %18 = arith.mulf %17, %15 : vector<8x128xf32>
      %cst_16 = arith.constant dense<0.000000e+00> : vector<8xf32>
      %19 = vector.multi_reduction <add>, %18, %cst_16 [1] : vector<8x128xf32> to vector<8xf32>
      %20 = vector.shape_cast %19 : vector<8xf32> to vector<8x1xf32>
      %c0_17 = arith.constant 0 : index
      %c0_18 = arith.constant 0 : index
      %21 = vector.load %arg6[%c0_17, %c0_18] : memref<8x1xf32, #tpu.memory_space<vmem>>, vector<8x1xf32>
      tpu.vector_store %arg6[%c0_17, %c0_18], %20 {strides = array<i32>} : memref<8x1xf32, #tpu.memory_space<vmem>>, vector<8x1xf32>,
    } else {
    }
    return
  }
  func.func @transform_0(%arg0: i32, %arg1: i32) -> (i32, i32) {
    %c0_i32 = arith.constant 0 : i32
    %c0_i32_0 = arith.constant 0 : i32
    return %arg0, %c0_i32 : i32, i32
  }
  func.func @transform_1(%arg0: i32, %arg1: i32) -> (i32, i32) {
    %c0_i32 = arith.constant 0 : i32
    %c0_i32_0 = arith.constant 0 : i32
    return %arg0, %c0_i32 : i32, i32
  }
  func.func @transform_2(%arg0: i32, %arg1: i32) -> (i32, i32) {
    %c0_i32 = arith.constant 0 : i32
    return %arg0, %arg1 : i32, i32
  }
  func.func @transform_3(%arg0: i32, %arg1: i32) -> (i32, i32) {
    %c0_i32 = arith.constant 0 : i32
    %c0_i32_0 = arith.constant 0 : i32
    return %arg1, %c0_i32 : i32, i32
  }
  func.func @transform_4(%arg0: i32, %arg1: i32) -> (i32, i32) {
    %c0_i32 = arith.constant 0 : i32
    %c0_i32_0 = arith.constant 0 : i32
    return %arg0, %c0_i32 : i32, i32
  }
}

</mosaic_0001>

<llo_original>
// kernel: tpu_custom_call.1
$region0: #{tpu_custom_call.1}
  #allocation0 [shape = 'u32[]', space=smem, size = 0x4, offset = 0x4, fixed_abs, tag = 'smem constant byte address 0x4 - core index']
  #allocation1 [shape = 'u32[144,128]{1,0:T(1,128)}', space=vmem, size = 0x12000, scoped, tag = 'internal scratch']
  #allocation2 [shape = 'f32[8,128]{1,0:T(8,128)}', space=vmem, size = 0x1000, scoped, tag = 'scratch operand']
  %s0 = inlined_call_operand.hbm [shape: bf16[8,128], index: 0, kind: input, shape index: {}]
  %s1 = inlined_call_operand.hbm [shape: bf16[8,128], index: 1, kind: input, shape index: {}]
  %s2 = inlined_call_operand.hbm [shape: bf16[8,128], index: 2, kind: input, shape index: {}]
  %s3 = inlined_call_operand.hbm [shape: bf16[128,128], index: 3, kind: input, shape index: {}]
  %s4 = inlined_call_operand.vmem [shape: f32[8,1], index: 4, kind: output, shape index: {}]
  %s5 = sld [smem:[#allocation0]]
  $region50: #{tpu_custom_call.1} parent=0
    _
  %s7 = ssub.s32 1, %s5
  %s8 = scalar_select 0, %s7, %s5
  $region1: #{tpu_custom_call.1} parent=0
    #allocation3 [shape = 'u8[2048]{0}', space=vmem, size = 0x800, scoped, tag = 'input window, operand 0, single buffered']
    #allocation4 [shape = 's32[1]{0}', space=sflag, size = 0x4, scoped, tag = 'scoped memory for tpu_custom_call.1']
    #allocation5 [shape = 'u8[2048]{0}', space=vmem, size = 0x800, scoped, tag = 'input window, operand 1, single buffered']
    #allocation6 [shape = 's32[1]{0}', space=sflag, size = 0x4, scoped, tag = 'scoped memory for tpu_custom_call.1']
    #allocation7 [shape = 'u8[2048]{0}', space=vmem, size = 0x800, scoped, tag = 'input window, operand 2, single buffered']
    #allocation8 [shape = 'u8[32768]{0}', space=vmem, size = 0x8000, scoped, tag = 'input window, operand 3, single buffered']
    #allocation9 [shape = 's32[1]{0}', space=sflag, size = 0x4, scoped, tag = 'scoped memory for tpu_custom_call.1']
    %9 = vsyncpa [#allocation4], 0
    %10 = vsyncpa [#allocation6], 0
    %11 = vsyncpa [#allocation9], 0
    // Predicated region
    $region2: #{tpu_custom_call.1} parent=1 // pred_check
      _
    $region3: #{tpu_custom_call.1} parent=1 // pred_check_branch
      %13 = sbr.rel (0) target = $region5
    $region4: #{tpu_custom_call.1} parent=1 // pred_region
      %s15 = ssub.s32 64, 64
      %16 = vsyncadd [#allocation4], %s15
      %s18 = sshll.u32 [#allocation3], 4
      %s19 = int_to_ptr.vmem [resolvable:$true] %s18
      %21 = dma.hbm_to_vmem [thread:$0]  %s0, 64, %s19, [#allocation4]
    $region5: #{tpu_custom_call.1} parent=1 // pred_fallthru
      _
    // Predicated region
    $region6: #{tpu_custom_call.1} parent=1 // pred_check
      _
    $region7: #{tpu_custom_call.1} parent=1 // pred_check_branch
      %23 = sbr.rel (0) target = $region9
    $region8: #{tpu_custom_call.1} parent=1 // pred_region
      %s25 = ssub.s32 64, 64
      %26 = vsyncadd [#allocation6], %s25
      %s28 = sshll.u32 [#allocation5], 4
      %s29 = int_to_ptr.vmem [resolvable:$true] %s28
      %31 = dma.hbm_to_vmem [thread:$0]  %s1, 64, %s29, [#allocation6]
    $region9: #{tpu_custom_call.1} parent=1 // pred_fallthru
      _
    // Predicated region
    $region10: #{tpu_custom_call.1} parent=1 // pred_check
      _
    $region11: #{tpu_custom_call.1} parent=1 // pred_check_branch
      %33 = sbr.rel (0) target = $region13
    $region12: #{tpu_custom_call.1} parent=1 // pred_region
      %s35 = ssub.s32 64, 64
      %36 = vsyncadd [#allocation6], %s35
      %s38 = sshll.u32 [#allocation7], 4
      %s39 = int_to_ptr.vmem [resolvable:$true] %s38
      %41 = dma.hbm_to_vmem [thread:$0]  %s2, 64, %s39, [#allocation6]
    $region13: #{tpu_custom_call.1} parent=1 // pred_fallthru
      _
    // Predicated region
    $region14: #{tpu_custom_call.1} parent=1 // pred_check
      _
    $region15: #{tpu_custom_call.1} parent=1 // pred_check_branch
      %43 = sbr.rel (0) target = $region17
    $region16: #{tpu_custom_call.1} parent=1 // pred_region
      %s45 = ssub.s32 1024, 1024
      %46 = vsyncadd [#allocation9], %s45
      %s47 = sshll.u32 [#allocation8], 4
      %s48 = int_to_ptr.vmem [resolvable:$true] %s47
      %53 = dma.hbm_to_vmem [thread:$0]  %s3, 1024, %s48, [#allocation9], 64, 64, 4
    $region17: #{tpu_custom_call.1} parent=1 // pred_fallthru
      _
    // Predicated region
    $region18: #{tpu_custom_call.1} parent=1 // pred_check
      _
    $region19: #{tpu_custom_call.1} parent=1 // pred_check_branch
      %55 = sbr.rel (0) target = $region21
    $region20: #{tpu_custom_call.1} parent=1 // pred_region
      %56 = dma.done [#allocation4], 64
    $region21: #{tpu_custom_call.1} parent=1 // pred_fallthru
      _
    // Predicated region
    $region22: #{tpu_custom_call.1} parent=1 // pred_check
      _
    $region23: #{tpu_custom_call.1} parent=1 // pred_check_branch
      %58 = sbr.rel (0) target = $region25
    $region24: #{tpu_custom_call.1} parent=1 // pred_region
      %59 = dma.done [#allocation6], 64
    $region25: #{tpu_custom_call.1} parent=1 // pred_fallthru
      _
    // Predicated region
    $region26: #{tpu_custom_call.1} parent=1 // pred_check
      _
    $region27: #{tpu_custom_call.1} parent=1 // pred_check_branch
      %61 = sbr.rel (0) target = $region29
    $region28: #{tpu_custom_call.1} parent=1 // pred_region
      %62 = dma.done [#allocation6], 64
    $region29: #{tpu_custom_call.1} parent=1 // pred_fallthru
      _
    // Predicated region
    $region30: #{tpu_custom_call.1} parent=1 // pred_check
      _
    $region31: #{tpu_custom_call.1} parent=1 // pred_check_branch
      %64 = sbr.rel (0) target = $region33
    $region32: #{tpu_custom_call.1} parent=1 // pred_region
      %65 = dma.done [#allocation9], 1024
    $region33: #{tpu_custom_call.1} parent=1 // pred_fallthru
      _
    %p67 = scmp.eq.s32.totalorder 0, 0
    // Predicated region
    $region34: #{tpu_custom_call.1} parent=1 // pred_check
      %p68 = pneg %p67
    $region35: #{tpu_custom_call.1} parent=1 // pred_check_branch
      %70 = sbr.rel (%p68) target = $region37
    $region36: #{tpu_custom_call.1} parent=1 // pred_region
      %71 = vst [vmem:[#allocation2] sm:$0xff] 0.0
    $region37: #{tpu_custom_call.1} parent=1 // pred_fallthru
      _
    %v72 = vld [vmem:[#allocation2] sm:$0xff]
    %v73 = vld [vmem:[#allocation7] sm:$0xf]
    %v74 = vld [vmem:[#allocation8] sm:$0xf]
    %v75 = vld [vmem:[#allocation8 + $0x4] sm:$0xf]
    %v76 = vld [vmem:[#allocation8 + $0x8] sm:$0xf]
    %v77 = vld [vmem:[#allocation8 + $0xc] sm:$0xf]
    %v78 = vld [vmem:[#allocation8 + $0x10] sm:$0xf]
    %v79 = vld [vmem:[#allocation8 + $0x14] sm:$0xf]
    %v80 = vld [vmem:[#allocation8 + $0x18] sm:$0xf]
    %v81 = vld [vmem:[#allocation8 + $0x1c] sm:$0xf]
    %v82 = vld [vmem:[#allocation8 + $0x20] sm:$0xf]
    %v83 = vld [vmem:[#allocation8 + $0x24] sm:$0xf]
    %v84 = vld [vmem:[#allocation8 + $0x28] sm:$0xf]
    %v85 = vld [vmem:[#allocation8 + $0x2c] sm:$0xf]
    %v86 = vld [vmem:[#allocation8 + $0x30] sm:$0xf]
    %v87 = vld [vmem:[#allocation8 + $0x34] sm:$0xf]
    %v88 = vld [vmem:[#allocation8 + $0x38] sm:$0xf]
    %v89 = vld [vmem:[#allocation8 + $0x3c] sm:$0xf]
    %v106 = vunpack.c.l.b16 %v74
    %v107 = vunpack.c.l.b16 %v75
    %v108 = vunpack.c.l.b16 %v76
    %v109 = vunpack.c.l.b16 %v77
    %v110 = vunpack.c.l.b16 %v78
    %v111 = vunpack.c.l.b16 %v79
    %v112 = vunpack.c.l.b16 %v80
    %v113 = vunpack.c.l.b16 %v81
    %v114 = vunpack.c.l.b16 %v82
    %v115 = vunpack.c.l.b16 %v83
    %v116 = vunpack.c.l.b16 %v84
    %v117 = vunpack.c.l.b16 %v85
    %v118 = vunpack.c.l.b16 %v86
    %v119 = vunpack.c.l.b16 %v87
    %v120 = vunpack.c.l.b16 %v88
    %v121 = vunpack.c.l.b16 %v89
    %v122 = vpack.c.b16 %v107, %v106
    %v123 = vpack.c.b16 %v109, %v108
    %v124 = vpack.c.b16 %v111, %v110
    %v125 = vpack.c.b16 %v113, %v112
    %v126 = vpack.c.b16 %v115, %v114
    %v127 = vpack.c.b16 %v117, %v116
    %v128 = vpack.c.b16 %v119, %v118
    %v129 = vpack.c.b16 %v121, %v120
    %138 = vmatprep.subr.bf16.mxu0 0
    %139 = vmatpush1.bf16.msra.mxu0 %v129
    %140 = vmatprep.subr.bf16.mxu0 0
    %141 = vmatpush1.bf16.msra.mxu0 %v128
    %142 = vmatprep.subr.bf16.mxu0 0
    %143 = vmatpush1.bf16.msra.mxu0 %v127
    %144 = vmatprep.subr.bf16.mxu0 0
    %145 = vmatpush1.bf16.msra.mxu0 %v126
    %146 = vmatprep.subr.bf16.mxu0 0
    %147 = vmatpush1.bf16.msra.mxu0 %v125
    %148 = vmatprep.subr.bf16.mxu0 0
    %149 = vmatpush1.bf16.msra.mxu0 %v124
    %150 = vmatprep.subr.bf16.mxu0 0
    %151 = vmatpush1.bf16.msra.mxu0 %v123
    %152 = vmatprep.subr.bf16.mxu0 0
    %153 = vmatpush1.bf16.msra.mxu0 %v122
    %154 = vmatprep.subr.bf16.mxu0 0
    %155 = vmatpush2.bf16.msra.mxu0 0
    %156 = vmatprep.subr.bf16.mxu0 0
    %157 = vmatpush2.bf16.msra.mxu0 0
    %158 = vmatprep.subr.bf16.mxu0 0
    %159 = vmatpush2.bf16.msra.mxu0 0
    %160 = vmatprep.subr.bf16.mxu0 0
    %161 = vmatpush2.bf16.msra.mxu0 0
    %162 = vmatprep.subr.bf16.mxu0 0
    %163 = vmatpush2.bf16.msra.mxu0 0
    %164 = vmatprep.subr.bf16.mxu0 0
    %165 = vmatpush2.bf16.msra.mxu0 0
    %166 = vmatprep.subr.bf16.mxu0 0
    %167 = vmatpush2.bf16.msra.mxu0 0
    %168 = vmatprep.subr.bf16.mxu0 0
    %169 = vmatpush2.bf16.msra.mxu0 0
    %170 = vmatprep.mubr.bf16.mxu0 0
    %171 = vmatmul.mubr.bf16.gmra.mxu0 %v73
    %v172 = vpop.f32.mrf.mxu0
    %v173 = vadd.f32 0.0, %v172
    %v174 = vpop.f32.mrf.mxu0
    %v175 = vpop.f32.mrf.mxu0
    %v176 = vpop.f32.mrf.mxu0
    %177 = vdwg.mxu0
    %v178 = vadd.f32 %v72, %v173
    %179 = vst [vmem:[#allocation2] sm:$0xff] %v178
    // Predicated region
    $region38: #{tpu_custom_call.1} parent=1 // pred_check
      %p180 = pneg %p67
    $region39: #{tpu_custom_call.1} parent=1 // pred_check_branch
      %182 = sbr.rel (%p180) target = $region41
    $region40: #{tpu_custom_call.1} parent=1 // pred_region
      %v183 = vld [vmem:[#allocation3] sm:$0xf]
      %v184 = vunpack.c.l.bf16 %v183
      %v185 = vld [vmem:[#allocation5] sm:$0xf]
      %v186 = vunpack.c.l.bf16 %v185
      %v187 = vld [vmem:[#allocation2] sm:$0xff]
      %v188 = vadd.f32 %v187, %v184
      %v189 = vmul.f32 %v188, %v186
      %190 = vadd.xlane.f32.xlu0 %v189
      %v191 = vpop.xlane.xlu0 %190
      %vm192 = vcmask 7168
      %193 = vst.msk [vmem:[%s4] sm:$0xff] %vm192, %v191
    $region41: #{tpu_custom_call.1} parent=1 // pred_fallthru
      _
    // Predicated region
    $region42: #{tpu_custom_call.1} parent=1 // pred_check
      _
    $region43: #{tpu_custom_call.1} parent=1 // pred_check_branch
      %195 = sbr.rel (0) target = $region45
    $region44: #{tpu_custom_call.1} parent=1 // pred_region
      _
    $region45: #{tpu_custom_call.1} parent=1 // pred_fallthru
      _
    // Predicated region
    $region46: #{tpu_custom_call.1} parent=1 // pred_check
      _
    $region47: #{tpu_custom_call.1} parent=1 // pred_check_branch
      %197 = sbr.rel (0) target = $region49
    $region48: #{tpu_custom_call.1} parent=1 // pred_region
      _
    $region49: #{tpu_custom_call.1} parent=1 // pred_fallthru
      _
    %198 = vsyncpa [#allocation4], 1
    %199 = vsyncpa [#allocation6], 1
    %200 = vsyncpa [#allocation9], 1

</llo_original>
